<compile_context>
chip_gen: v5e
topology: v5e:2x2
jax: 0.10.0
libtpu: 0.0.40
codegen_flags: <defaults>
</compile_context>

<pallas_src>
import math

import jax
import jax.numpy as jnp
from jax.experimental import pallas as pl
from jax.experimental.pallas import tpu as pltpu

_LANE = 128
_DEFAULT_BLOCK_BYTES = 2 * 1024 * 1024  # ~2 MiB per buffer (x4 when double-buffered)


def _copy_kernel(x_ref, o_ref):
    # Identity copy of one (block_rows, lane) tile — the contiguous materialization.
    o_ref[...] = x_ref[...]


def _pick_lane_width(total: int):
    """Widest lane dim (multiple of 128, up to 4096) that exactly divides total."""
    for lane in (4096, 2048, 1024, 512, 256, 128):
        if total % lane == 0:
            return lane
    return None


def _pick_block_rows(rows: int, lane: int, itemsize: int, max_block_bytes: int) -> int:
    """Block row count: ~max_block_bytes per buffer, aligned to the native packed
    sublane tile (8 rows for 32-bit, 16 for bf16, 32 for int8/fp8).  Prefers an
    exact divisor of `rows` near the target so there is no masked partial last
    block; otherwise falls back to the aligned target (cdiv grid handles the
    ragged tail with masked stores)."""
    packing = max(1, 4 // itemsize)
    sub_mult = 8 * packing
    target = max(1, max_block_bytes // (lane * itemsize))
    if target >= rows:
        return rows  # one block covering the full row extent (full-dim block is legal)

    # Prefer an aligned exact divisor of rows in [target/2, target].
    lo = max(sub_mult, (target // 2 // sub_mult) * sub_mult)
    best = None
    cand = (target // sub_mult) * sub_mult
    while cand >= lo:
        if rows % cand == 0:
            best = cand
            break
        cand -= sub_mult
    if best is not None:
        return best

    block_rows = max(sub_mult, (target // sub_mult) * sub_mult)
    return min(block_rows, rows)


def pallas_reshape(x: jax.Array, target_shape, *,
                   max_block_bytes: int = _DEFAULT_BLOCK_BYTES,
                   donate_input: bool = False) -> jax.Array:
    """Equivalent of `x.contiguous().view(-1, *target_shape)` with the
    contiguous-copy materialization done by a Pallas TPU kernel."""
    target_shape = tuple(int(d) for d in target_shape)
    total = math.prod(x.shape)
    tgt_elems = math.prod(target_shape)
    if tgt_elems == 0 or total % tgt_elems != 0:
        raise ValueError(
            f"cannot view {x.shape} ({total} elems) as (-1, {target_shape})")
    lead = total // tgt_elems
    out_shape = (lead,) + target_shape

    # Row-major flatten == torch .contiguous().view() ordering (metadata only).
    flat = x.reshape(-1)

    lane = _pick_lane_width(total)
    if lane is None or total == 0:
        # Element count not a multiple of 128: tiling would need a pad + slice
        # round-trip (2 extra HBM passes).  Since .contiguous() on an immutable
        # JAX array is semantically a no-op, return the metadata-only reshape.
        return flat.reshape(out_shape)

    rows = total // lane
    itemsize = jnp.dtype(x.dtype).itemsize
    block_rows = _pick_block_rows(rows, lane, itemsize, max_block_bytes)
    grid = (pl.cdiv(rows, block_rows),)  # partial last block (if any) is masked

    # Explicit VMEM budget: in + out, double-buffered, plus slack.  Stays well
    # under physical VMEM on every chip (v7x per-TC VMEM is 64 MiB).
    vmem_bytes = min(4 * block_rows * lane * itemsize + (4 << 20), 48 << 20)

    x2d = flat.reshape(rows, lane)

    out2d = pl.pallas_call(
        _copy_kernel,
        out_shape=jax.ShapeDtypeStruct((rows, lane), x.dtype),
        grid=grid,
        in_specs=[pl.BlockSpec((block_rows, lane), lambda i: (i, 0))],
        out_specs=pl.BlockSpec((block_rows, lane), lambda i: (i, 0)),
        compiler_params=pltpu.CompilerParams(
            dimension_semantics=("parallel",),      # shards across both TCs on v7x
            vmem_limit_bytes=vmem_bytes),
        # Aliasing only pays off if the caller actually donates x's buffer;
        # otherwise XLA inserts a defensive copy of the parameter, so keep it
        # opt-in rather than default.
        input_output_aliases=({0: 0} if donate_input else {}),
    )(x2d)

    return out2d.reshape(out_shape)


class Reshape:
    """JAX/Pallas mirror of the PyTorch Reshape nn.Module (no parameters)."""

    def __init__(self, target_shape):
        self.target_shape = tuple(target_shape)

    def __call__(self, x):
        return pallas_reshape(x, self.target_shape)


if __name__ == "__main__":
    key = jax.random.PRNGKey(0)
    k1, k2, k3, k4 = jax.random.split(key, 4)

    # Case 1: NCHW-ish input [2, 4, 16, 16] viewed as (-1, 8, 128).
    x1 = jax.random.normal(k1, (2, 4, 16, 16), dtype=jnp.float32)
    mod = Reshape((8, 128))
    out1 = jax.block_until_ready(jax.jit(lambda a: mod(a))(x1))
    ref1 = x1.reshape((-1, 8, 128))
    assert out1.shape == (2, 8, 128) and out1.dtype == x1.dtype
    assert jnp.array_equal(out1, ref1), "case 1 mismatch"

    # Case 2: force a multi-step grid (small block budget); rows=36 is not a
    # multiple of the chosen block, exercising the masked partial last block.
    x2 = jax.random.normal(k2, (2, 4, 36, 128), dtype=jnp.float32)
    f2 = jax.jit(lambda a: pallas_reshape(a, (36, 128),
                                          max_block_bytes=4096 * 4 * 8))
    out2 = jax.block_until_ready(f2(x2))
    ref2 = x2.reshape((-1, 36, 128))
    assert out2.shape == ref2.shape and jnp.array_equal(out2, ref2), "case 2 mismatch"

    # Case 3: bf16 input (packed dtype path).
    x3 = jax.random.normal(k3, (2, 4, 16, 16), dtype=jnp.bfloat16)
    out3 = jax.block_until_ready(jax.jit(lambda a: pallas_reshape(a, (4, 256)))(x3))
    ref3 = x3.reshape((-1, 4, 256))
    assert out3.dtype == jnp.bfloat16 and jnp.array_equal(out3, ref3), "case 3 mismatch"

    # Case 4: element count not a multiple of 128 -> metadata-only fallback.
    x4 = jax.random.normal(k4, (2, 3, 5, 7), dtype=jnp.float32)
    out4 = jax.block_until_ready(pallas_reshape(x4, (5, 7)))
    ref4 = x4.reshape((-1, 5, 7))
    assert out4.shape == (6, 5, 7) and jnp.array_equal(out4, ref4), "case 4 mismatch"

    print("KERNEL_OK")
</pallas_src>

<mosaic_0001>
module attributes {stable_mosaic.version = 11 : i64} {
  func.func @_copy_kernel(%arg0: i32, %arg1: memref<1x2048xf32, #tpu.memory_space<vmem>>, %arg2: memref<1x2048xf32, #tpu.memory_space<vmem>>) attributes {dimension_semantics = [#tpu.dimension_semantics<parallel>], iteration_bounds = array<i64: 1>, scalar_prefetch = 0 : i64, scratch_operands = 0 : i64, tpu.core_type = #tpu.core_type<tc>, window_params = [{transform_indices = @transform_0, window_bounds = array<i64: 1, 2048>}, {transform_indices = @transform_1, window_bounds = array<i64: 1, 2048>}]} {
    %c0 = arith.constant 0 : index
    %c0_0 = arith.constant 0 : index
    %0 = vector.load %arg1[%c0, %c0_0] : memref<1x2048xf32, #tpu.memory_space<vmem>>, vector<1x2048xf32>
    %c0_1 = arith.constant 0 : index
    %c0_2 = arith.constant 0 : index
    %1 = vector.load %arg2[%c0_1, %c0_2] : memref<1x2048xf32, #tpu.memory_space<vmem>>, vector<1x2048xf32>
    tpu.vector_store %arg2[%c0_1, %c0_2], %0 {strides = array<i32>} : memref<1x2048xf32, #tpu.memory_space<vmem>>, vector<1x2048xf32>,
    return
  }
  func.func @transform_0(%arg0: i32) -> (i32, i32) {
    %c0_i32 = arith.constant 0 : i32
    %c0_i32_0 = arith.constant 0 : i32
    return %arg0, %c0_i32 : i32, i32
  }
  func.func @transform_1(%arg0: i32) -> (i32, i32) {
    %c0_i32 = arith.constant 0 : i32
    %c0_i32_0 = arith.constant 0 : i32
    return %arg0, %c0_i32 : i32, i32
  }
}

</mosaic_0001>

<llo_original>
// kernel: _lambda_.1
$region0: #{_lambda_.1}
  #allocation0 [shape = 'u32[]', space=smem, size = 0x4, offset = 0x4, fixed_abs, tag = 'smem constant byte address 0x4 - core index']
  #allocation1 [shape = 'u32[72,128]{1,0:T(1,128)}', space=vmem, size = 0x9000, scoped, tag = 'internal scratch']
  %s0 = inlined_call_operand.vmem [shape: f32[1,2048], index: 0, kind: input, shape index: {}]
  %s1 = inlined_call_operand.hbm [shape: f32[1,2048], index: 1, kind: output, shape index: {}]
  %s2 = sld [smem:[#allocation0]]
  $region14: #{_lambda_.1} parent=0
    _
  %s4 = ssub.s32 1, %s2
  %s5 = scalar_select 0, %s4, %s2
  $region1: #{_lambda_.1} parent=0
    #allocation2 [shape = 'u8[8192]{0}', space=vmem, size = 0x2000, scoped, tag = 'output window, operand 0, single buffered']
    #allocation3 [shape = 's32[1]{0}', space=sflag, size = 0x4, scoped, tag = 'scoped memory for _lambda_.1']
    %6 = vsyncpa [#allocation3], 0
    // Predicated region
    $region2: #{_lambda_.1} parent=1 // pred_check
      _
    $region3: #{_lambda_.1} parent=1 // pred_check_branch
      %8 = sbr.rel (0) target = $region5
    $region4: #{_lambda_.1} parent=1 // pred_region
      _
    $region5: #{_lambda_.1} parent=1 // pred_fallthru
      _
    %v9 = vld [vmem:[%s0] sm:$0xff]
    %v10 = vld [vmem:[%s0 + $0x8] sm:$0xff]
    %11 = vst [vmem:[#allocation2] sm:$0xff] %v9
    %12 = vst [vmem:[#allocation2 + $0x8] sm:$0xff] %v10
    // Predicated region
    $region6: #{_lambda_.1} parent=1 // pred_check
      _
    $region7: #{_lambda_.1} parent=1 // pred_check_branch
      %14 = sbr.rel (0) target = $region9
    $region8: #{_lambda_.1} parent=1 // pred_region
      %16 = vsyncadd [#allocation3], 0
      %s18 = sshll.u32 [#allocation2], 4
      %s19 = int_to_ptr.vmem [resolvable:$true] %s18
      %s20 = sshll.u32 %s1, 4
      %s21 = int_to_ptr.hbm [resolvable:$true] %s20
      %23 = dma.vmem_to_hbm [thread:$0]  %s19, 256, %s21, [#allocation3]
    $region9: #{_lambda_.1} parent=1 // pred_fallthru
      _
    // Predicated region
    $region10: #{_lambda_.1} parent=1 // pred_check
      _
    $region11: #{_lambda_.1} parent=1 // pred_check_branch
      %25 = sbr.rel (0) target = $region13
    $region12: #{_lambda_.1} parent=1 // pred_region
      %27 = dma.done [#allocation3], 256
    $region13: #{_lambda_.1} parent=1 // pred_fallthru
      _
    %28 = vsyncpa [#allocation3], 1

</llo_original>
